<compile_context>
chip_gen: v5e
topology: v5e:2x2
jax: 0.10.0
libtpu: 0.0.40
codegen_flags: <defaults>
</compile_context>

<pallas_src>
import functools

import jax
import jax.numpy as jnp
from jax.experimental import pallas as pl
from jax.experimental.pallas import tpu as pltpu

BN_EPS = 1e-5


def _round_up(v, m):
    return (v + m - 1) // m * m


def _vmem_limit_bytes():
    """Per-generation scoped-VMEM budget with headroom."""
    cap = 128 << 20  # v5e / v6e physical VMEM (per TensorCore)
    try:
        info = pltpu.get_tpu_info()
        cap = int(getattr(info, "vmem_capacity_bytes", cap))
    except Exception:
        pass
    if cap <= (96 << 20):
        # v7x-class (64 MiB / TC): leave ~20% headroom for compiler internal
        # scratch, semaphores and the double-buffered output block.
        return int(cap * 0.80)
    # v5e / v6e: allow most of the 128 MiB instead of a v7x-shaped 64 MiB clamp.
    return int(min(cap - (20 << 20), 110 << 20))


def _dense_bn_kernel(x_ref, w_ref, gamma_ref, beta_ref, o_ref, acc_ref, *,
                     tk, x_resident):
    k_idx = pl.program_id(1)

    if x_resident:
        # x is resident across the whole grid; slice the current K chunk.
        k0 = pl.multiple_of(k_idx * tk, 128)
        x_blk = x_ref[:, pl.ds(k0, tk)]
    else:
        x_blk = x_ref[...]

    # MXU matmul on the (N, tk) x (tk, tm) tiles, f32 accumulation.
    part = jnp.dot(x_blk, w_ref[...], preferred_element_type=jnp.float32)

    @pl.when(k_idx == 0)
    def _first():
        # Direct write: saves one (n, tm) f32 zero-store + accumulate read per M tile.
        acc_ref[...] = part

    @pl.when(k_idx > 0)
    def _accum():
        acc_ref[...] += part

    @pl.when(k_idx == pl.num_programs(1) - 1)
    def _epilogue():
        # BatchNorm1d (training mode) over the batch axis; the full batch is resident
        # in this block, so the statistics are exact. All BN math stays in f32
        # (v5e has no bf16 VPU/EUP). Linear bias is omitted: it cancels in (y - mean).
        y = acc_ref[...]                                  # (N, tm) f32
        mean = jnp.mean(y, axis=0, keepdims=True)         # (1, tm)
        d = y - mean
        var = jnp.mean(d * d, axis=0, keepdims=True)      # biased variance
        y_hat = d * jax.lax.rsqrt(var + BN_EPS)           # rsqrt -> EUP slot (cheap)
        out = y_hat * gamma_ref[...] + beta_ref[...]
        # sigma = identity (module default activation)
        o_ref[...] = out.astype(o_ref.dtype)


def prepare_dense_params(weight, gamma, beta, *, compute_dtype=jnp.float32,
                         tile_m=None, tile_k=None, expected_batch=128):
    """Pad / cast weight, gamma, beta ONCE (hoisted off the per-call path)."""
    k, m = weight.shape
    cdt = jnp.dtype(compute_dtype)
    elt = cdt.itemsize
    vmem_limit = _vmem_limit_bytes()

    m_pad_min = _round_up(m, 128)
    k_pad_min = _round_up(k, 128)

    # Bigger tiles in the small-batch (W-streaming, HBM-bound) regime.
    small_batch = expected_batch <= 256
    tm = min(tile_m or (512 if small_batch else 256), m_pad_min)
    tk = min(tile_k or (1024 if small_batch else 512), k_pad_min)

    # Keep the parallel M axis >= 2 tiles when affordable (v7x has 2 TensorCores).
    if m_pad_min >= 256 and tm >= m_pad_min and (m_pad_min // 2) % 128 == 0:
        tm = m_pad_min // 2

    def _footprint(tm_, tk_, n_):
        w_buf = 2 * tk_ * tm_ * elt                 # double-buffered W stream
        out_buf = 2 * n_ * tm_ * 4                  # double-buffered output block
        acc = n_ * tm_ * 4                          # resident accumulator
        x_res = 2 * n_ * _round_up(k, tk_) * elt    # resident x (conservative x2)
        gb = 4 * tm_ * 4                            # gamma / beta blocks
        return w_buf + out_buf + acc + x_res + gb

    def _shrink(t):
        return max(128, _round_up(t // 2, 128))

    n_est = max(int(expected_batch), 8)
    while _footprint(tm, tk, n_est) > vmem_limit and tk > 128:
        tk = _shrink(tk)
    while _footprint(tm, tk, n_est) > vmem_limit and tm > 128:
        tm = _shrink(tm)

    m_pad = _round_up(m, tm)
    k_pad = _round_up(k, tk)

    w_p = jnp.zeros((k_pad, m_pad), cdt).at[:k, :m].set(jnp.asarray(weight, cdt))
    g_p = jnp.zeros((1, m_pad), jnp.float32).at[:, :m].set(
        jnp.reshape(jnp.asarray(gamma, jnp.float32), (1, m)))
    b_p = jnp.zeros((1, m_pad), jnp.float32).at[:, :m].set(
        jnp.reshape(jnp.asarray(beta, jnp.float32), (1, m)))

    return dict(w_p=w_p, g_p=g_p, b_p=b_p, k=k, m=m, k_pad=k_pad, m_pad=m_pad,
                tm=tm, tk=tk, cdt=cdt, vmem_limit=vmem_limit)


def dense_apply(x, params, bias=None, *, out_dtype=jnp.float32):
    """x: (N, in_features) -> (N, out_features).

    `bias` is accepted only for API parity with the PyTorch module; under
    training-mode BatchNorm it cancels exactly, so it is never loaded. NOTE:
    this is only valid with batch statistics (training mode), which is what
    the reference module's forward uses.
    """
    del bias  # mathematically redundant under the following BatchNorm
    n, k = x.shape
    assert k == params["k"], "in_features mismatch with prepared params"

    cdt = params["cdt"]
    tm, tk = params["tm"], params["tk"]
    k_pad, m_pad, m = params["k_pad"], params["m_pad"], params["m"]
    elt = cdt.itemsize
    vmem_limit = params["vmem_limit"]
    out_elt = jnp.dtype(out_dtype).itemsize

    # Guard on N: the output block and accumulator scale with the full batch.
    base = (2 * tk * tm * elt) + (2 * n * tm * out_elt) + (n * tm * 4) + (4 * tm * 4)
    # TODO(synk): large-N two-pass BatchNorm (sum / sum-of-squares over N tiles)
    # is not implemented; raise instead of silently overflowing VMEM.
    if base + 2 * n * tk * elt > vmem_limit:
        raise ValueError(
            f"batch {n} too large for the single-pass BatchNorm kernel "
            f"({(base + 2 * n * tk * elt) >> 20} MiB > {vmem_limit >> 20} MiB VMEM)")

    # Keep x resident in VMEM (one HBM read total) when it fits; else stream per K tile.
    x_resident = (base + 2 * n * k_pad * elt) <= vmem_limit

    # Pad / cast x per call only when needed.
    if k_pad == k and x.dtype == cdt:
        x_p = x
    else:
        x_p = jnp.zeros((n, k_pad), cdt).at[:, :k].set(x.astype(cdt))

    if x_resident:
        x_spec = pl.BlockSpec((n, k_pad), lambda j, kk: (0, 0))   # resident, single DMA
    else:
        x_spec = pl.BlockSpec((n, tk), lambda j, kk: (0, kk))     # streamed per K tile

    kernel = functools.partial(_dense_bn_kernel, tk=tk, x_resident=x_resident)
    grid = (m_pad // tm, k_pad // tk)

    out_pad = pl.pallas_call(
        kernel,
        out_shape=jax.ShapeDtypeStruct((n, m_pad), out_dtype),
        grid_spec=pltpu.PrefetchScalarGridSpec(
            num_scalar_prefetch=0,
            grid=grid,
            in_specs=[
                x_spec,
                pl.BlockSpec((tk, tm), lambda j, kk: (kk, j)),    # W (dominant stream)
                pl.BlockSpec((1, tm), lambda j, kk: (0, j)),      # gamma
                pl.BlockSpec((1, tm), lambda j, kk: (0, j)),      # beta
            ],
            out_specs=pl.BlockSpec((n, tm), lambda j, kk: (0, j)),
            scratch_shapes=[pltpu.VMEM((n, tm), jnp.float32)],
        ),
        compiler_params=pltpu.CompilerParams(
            dimension_semantics=("parallel", "arbitrary"),
            vmem_limit_bytes=int(vmem_limit),
        ),
    )(x_p, params["w_p"], params["g_p"], params["b_p"])

    return out_pad[:, :m]


def dense_forward(x, weight, gamma, beta, bias=None, *, compute_dtype=jnp.float32,
                  out_dtype=jnp.float32):
    """Convenience wrapper (prepares params on every call; prefer prepare + apply)."""
    params = prepare_dense_params(weight, gamma, beta, compute_dtype=compute_dtype,
                                  expected_batch=x.shape[0])
    return dense_apply(x, params, bias, out_dtype=out_dtype)


if __name__ == "__main__":
    N = 8          # batch (nodes)
    IN_F = 32      # in_features
    OUT_F = 32     # out_features

    key = jax.random.PRNGKey(0)
    k_x, k_w, k_b = jax.random.split(key, 3)

    # reset_parameters(): glorot U(-stdv, stdv); bias would be zeros, but use a
    # nonzero bias here to demonstrate that it cancels under BatchNorm.
    stdv = (6.0 / (IN_F + OUT_F)) ** 0.5
    weight = jax.random.uniform(k_w, (IN_F, OUT_F), jnp.float32, -stdv, stdv)
    bias = jax.random.uniform(k_b, (OUT_F,), jnp.float32, -0.5, 0.5)
    # BatchNorm1d affine params (default init: weight=1, bias=0).
    gamma = jnp.ones((OUT_F,), jnp.float32)
    beta = jnp.zeros((OUT_F,), jnp.float32)

    x = jax.random.normal(k_x, (N, IN_F), jnp.float32)
    adj = jnp.eye(N, dtype=jnp.float32)  # forward ignores adj (parity with module)

    # Pure-JAX reference (includes the bias, like the PyTorch forward).
    y_ref = x @ weight + bias[None, :]
    mean = jnp.mean(y_ref, axis=0, keepdims=True)
    var = jnp.mean((y_ref - mean) ** 2, axis=0, keepdims=True)
    ref = (y_ref - mean) / jnp.sqrt(var + BN_EPS) * gamma[None, :] + beta[None, :]

    # --- f32 path: params padded/cast once (hoisted), then applied ---
    params_f32 = prepare_dense_params(weight, gamma, beta,
                                      compute_dtype=jnp.float32, expected_batch=N)
    out = dense_apply(x, params_f32, bias)
    jax.block_until_ready(out)
    assert out.shape == (N, OUT_F)
    assert jnp.allclose(out, ref, atol=1e-4, rtol=1e-4), "f32 kernel mismatch vs reference"

    # --- bf16 storage / matmul path (f32 accumulation + f32 BN epilogue), bf16 output ---
    params_bf16 = prepare_dense_params(weight, gamma, beta,
                                       compute_dtype=jnp.bfloat16, expected_batch=N)
    out_bf16 = dense_apply(x, params_bf16, bias, out_dtype=jnp.bfloat16)
    jax.block_until_ready(out_bf16)
    assert out_bf16.shape == (N, OUT_F)
    assert out_bf16.dtype == jnp.bfloat16
    assert jnp.allclose(out_bf16.astype(jnp.float32), ref, atol=5e-2, rtol=5e-2), \
        "bf16 kernel mismatch vs reference"

    print("KERNEL_OK")
</pallas_src>

<mosaic_0001>
module attributes {stable_mosaic.version = 11 : i64} {
  func.func @_dense_bn_kernel(%arg0: i32, %arg1: i32, %arg2: memref<8x128xf32, #tpu.memory_space<vmem>>, %arg3: memref<128x128xf32, #tpu.memory_space<vmem>>, %arg4: memref<1x128xf32, #tpu.memory_space<vmem>>, %arg5: memref<1x128xf32, #tpu.memory_space<vmem>>, %arg6: memref<8x128xf32, #tpu.memory_space<vmem>>, %arg7: memref<8x128xf32, #tpu.memory_space<vmem>>) attributes {dimension_semantics = [#tpu.dimension_semantics<parallel>, #tpu.dimension_semantics<arbitrary>], iteration_bounds = array<i64: 1, 1>, scalar_prefetch = 0 : i64, scratch_operands = 1 : i64, tpu.core_type = #tpu.core_type<tc>, window_params = [{pipeline_mode = #tpu.pipeline_mode<synchronous>, transform_indices = @transform_0, window_bounds = array<i64: 8, 128>}, {transform_indices = @transform_1, window_bounds = array<i64: 128, 128>}, {transform_indices = @transform_2, window_bounds = array<i64: 1, 128>}, {transform_indices = @transform_3, window_bounds = array<i64: 1, 128>}, {transform_indices = @transform_4, window_bounds = array<i64: 8, 128>}]} {
    %c128_i32 = arith.constant 128 : i32
    %0 = arith.muli %arg1, %c128_i32 : i32
    %1 = tpu.assume_multiple %0, 128 : i32
    %c0 = arith.constant 0 : index
    %2 = arith.index_cast %1 : i32 to index
    %3 = vector.load %arg2[%c0, %2] : memref<8x128xf32, #tpu.memory_space<vmem>>, vector<8x128xf32>
    %c0_0 = arith.constant 0 : index
    %c0_1 = arith.constant 0 : index
    %4 = vector.load %arg3[%c0_0, %c0_1] : memref<128x128xf32, #tpu.memory_space<vmem>>, vector<128x128xf32>
    %cst = arith.constant dense<0.000000e+00> : vector<8x128xf32>
    %5 = tpu.matmul %3, %4, %cst {dimension_numbers = #tpu.dot_dimension_numbers<[1], [0], [0], [1], [0, 0, 1, 1], [], []>} : vector<8x128xf32>, vector<128x128xf32>, vector<8x128xf32> -> vector<8x128xf32>
    %c0_i32 = arith.constant 0 : i32
    %6 = arith.cmpi eq, %arg1, %c0_i32 : i32
    %7 = arith.extui %6 : i1 to i32
    %c0_i32_2 = arith.constant 0 : i32
    %8 = arith.cmpi ne, %7, %c0_i32_2 : i32
    scf.if %8 {
      %c0_7 = arith.constant 0 : index
      %c0_8 = arith.constant 0 : index
      %15 = vector.load %arg7[%c0_7, %c0_8] : memref<8x128xf32, #tpu.memory_space<vmem>>, vector<8x128xf32>
      tpu.vector_store %arg7[%c0_7, %c0_8], %5 {strides = array<i32>} : memref<8x128xf32, #tpu.memory_space<vmem>>, vector<8x128xf32>,
    } else {
    }
    %c0_i32_3 = arith.constant 0 : i32
    %9 = arith.cmpi sgt, %arg1, %c0_i32_3 : i32
    %10 = arith.extui %9 : i1 to i32
    %c0_i32_4 = arith.constant 0 : i32
    %11 = arith.cmpi ne, %10, %c0_i32_4 : i32
    scf.if %11 {
      %c0_7 = arith.constant 0 : index
      %c0_8 = arith.constant 0 : index
      %15 = vector.load %arg7[%c0_7, %c0_8] : memref<8x128xf32, #tpu.memory_space<vmem>>, vector<8x128xf32>
      %16 = arith.addf %15, %5 : vector<8x128xf32>
      %c0_9 = arith.constant 0 : index
      %c0_10 = arith.constant 0 : index
      %17 = vector.load %arg7[%c0_9, %c0_10] : memref<8x128xf32, #tpu.memory_space<vmem>>, vector<8x128xf32>
      tpu.vector_store %arg7[%c0_9, %c0_10], %16 {strides = array<i32>} : memref<8x128xf32, #tpu.memory_space<vmem>>, vector<8x128xf32>,
    } else {
    }
    %c0_i32_5 = arith.constant 0 : i32
    %12 = arith.cmpi eq, %arg1, %c0_i32_5 : i32
    %13 = arith.extui %12 : i1 to i32
    %c0_i32_6 = arith.constant 0 : i32
    %14 = arith.cmpi ne, %13, %c0_i32_6 : i32
    scf.if %14 {
      %c0_7 = arith.constant 0 : index
      %c0_8 = arith.constant 0 : index
      %15 = vector.load %arg7[%c0_7, %c0_8] : memref<8x128xf32, #tpu.memory_space<vmem>>, vector<8x128xf32>
      %cst_9 = arith.constant dense<0.000000e+00> : vector<128xf32>
      %16 = vector.multi_reduction <add>, %15, %cst_9 [0] : vector<8x128xf32> to vector<128xf32>
      %17 = vector.shape_cast %16 : vector<128xf32> to vector<1x128xf32>
      %cst_10 = arith.constant 8.000000e+00 : f32
      %18 = vector.broadcast %cst_10 : f32 to vector<1x128xf32>
      %19 = arith.divf %17, %18 : vector<1x128xf32>
      %20 = vector.broadcast %19 : vector<1x128xf32> to vector<8x128xf32>
      %21 = arith.subf %15, %20 : vector<8x128xf32>
      %22 = arith.mulf %21, %21 : vector<8x128xf32>
      %cst_11 = arith.constant dense<0.000000e+00> : vector<128xf32>
      %23 = vector.multi_reduction <add>, %22, %cst_11 [0] : vector<8x128xf32> to vector<128xf32>
      %24 = vector.shape_cast %23 : vector<128xf32> to vector<1x128xf32>
      %cst_12 = arith.constant 8.000000e+00 : f32
      %25 = vector.broadcast %cst_12 : f32 to vector<1x128xf32>
      %26 = arith.divf %24, %25 : vector<1x128xf32>
      %cst_13 = arith.constant 9.99999974E-6 : f32
      %27 = vector.broadcast %cst_13 : f32 to vector<1x128xf32>
      %28 = arith.addf %26, %27 : vector<1x128xf32>
      %29 = math.rsqrt %28 : vector<1x128xf32>
      %30 = vector.broadcast %29 : vector<1x128xf32> to vector<8x128xf32>
      %31 = arith.mulf %21, %30 : vector<8x128xf32>
      %c0_14 = arith.constant 0 : index
      %c0_15 = arith.constant 0 : index
      %32 = vector.load %arg4[%c0_14, %c0_15] : memref<1x128xf32, #tpu.memory_space<vmem>>, vector<1x128xf32>
      %33 = vector.broadcast %32 : vector<1x128xf32> to vector<8x128xf32>
      %34 = arith.mulf %31, %33 : vector<8x128xf32>
      %c0_16 = arith.constant 0 : index
      %c0_17 = arith.constant 0 : index
      %35 = vector.load %arg5[%c0_16, %c0_17] : memref<1x128xf32, #tpu.memory_space<vmem>>, vector<1x128xf32>
      %36 = vector.broadcast %35 : vector<1x128xf32> to vector<8x128xf32>
      %37 = arith.addf %34, %36 : vector<8x128xf32>
      %c0_18 = arith.constant 0 : index
      %c0_19 = arith.constant 0 : index
      %38 = vector.load %arg6[%c0_18, %c0_19] : memref<8x128xf32, #tpu.memory_space<vmem>>, vector<8x128xf32>
      tpu.vector_store %arg6[%c0_18, %c0_19], %37 {strides = array<i32>} : memref<8x128xf32, #tpu.memory_space<vmem>>, vector<8x128xf32>,
    } else {
    }
    return
  }
  func.func @transform_0(%arg0: i32, %arg1: i32) -> (i32, i32) {
    %c0_i32 = arith.constant 0 : i32
    %c0_i32_0 = arith.constant 0 : i32
    %c0_i32_1 = arith.constant 0 : i32
    return %c0_i32, %c0_i32_0 : i32, i32
  }
  func.func @transform_1(%arg0: i32, %arg1: i32) -> (i32, i32) {
    %c0_i32 = arith.constant 0 : i32
    return %arg1, %arg0 : i32, i32
  }
  func.func @transform_2(%arg0: i32, %arg1: i32) -> (i32, i32) {
    %c0_i32 = arith.constant 0 : i32
    %c0_i32_0 = arith.constant 0 : i32
    return %c0_i32, %arg0 : i32, i32
  }
  func.func @transform_3(%arg0: i32, %arg1: i32) -> (i32, i32) {
    %c0_i32 = arith.constant 0 : i32
    %c0_i32_0 = arith.constant 0 : i32
    return %c0_i32, %arg0 : i32, i32
  }
  func.func @transform_4(%arg0: i32, %arg1: i32) -> (i32, i32) {
    %c0_i32 = arith.constant 0 : i32
    %c0_i32_0 = arith.constant 0 : i32
    return %c0_i32, %arg0 : i32, i32
  }
}

</mosaic_0001>

<llo_original>
// kernel: tpu_custom_call.1
$region0: #{tpu_custom_call.1}
  #allocation0 [shape = 'u32[]', space=smem, size = 0x4, offset = 0x4, fixed_abs, tag = 'smem constant byte address 0x4 - core index']
  #allocation1 [shape = 'u32[72,128]{1,0:T(1,128)}', space=vmem, size = 0x9000, scoped, tag = 'internal scratch']
  #allocation2 [shape = 'f32[8,128]{1,0:T(8,128)}', space=vmem, size = 0x1000, scoped, tag = 'scratch operand']
  %s0 = inlined_call_operand.hbm [shape: f32[8,128], index: 0, kind: input, shape index: {}]
  %s1 = inlined_call_operand.hbm [shape: f32[128,128], index: 1, kind: input, shape index: {}]
  %s2 = inlined_call_operand.vmem [shape: f32[1,128], index: 2, kind: input, shape index: {}]
  %s3 = inlined_call_operand.vmem [shape: f32[1,128], index: 3, kind: input, shape index: {}]
  %s4 = inlined_call_operand.hbm [shape: f32[8,128], index: 4, kind: output, shape index: {}]
  %s5 = sld [smem:[#allocation0]]
  $region46: #{tpu_custom_call.1} parent=0
    _
  %s7 = ssub.s32 1, %s5
  %s8 = scalar_select 0, %s7, %s5
  $region1: #{tpu_custom_call.1} parent=0
    #allocation3 [shape = 'u8[4096]{0}', space=vmem, size = 0x1000, scoped, tag = 'input window, operand 0, single buffered']
    #allocation4 [shape = 's32[1]{0}', space=sflag, size = 0x4, scoped, tag = 'scoped memory for tpu_custom_call.1']
    #allocation5 [shape = 's32[1]{0}', space=sflag, size = 0x4, scoped, tag = 'scoped memory for tpu_custom_call.1']
    #allocation6 [shape = 'u8[65536]{0}', space=vmem, size = 0x10000, scoped, tag = 'input window, operand 1, single buffered']
    #allocation7 [shape = 's32[1]{0}', space=sflag, size = 0x4, scoped, tag = 'scoped memory for tpu_custom_call.1']
    #allocation8 [shape = 'u8[4096]{0}', space=vmem, size = 0x1000, scoped, tag = 'output window, operand 0, single buffered']
    %9 = vsyncpa [#allocation4], 0
    %10 = vsyncpa [#allocation7], 0
    %11 = vsyncpa [#allocation5], 0
    // Predicated region
    $region2: #{tpu_custom_call.1} parent=1 // pred_check
      _
    $region3: #{tpu_custom_call.1} parent=1 // pred_check_branch
      %13 = sbr.rel (0) target = $region5
    $region4: #{tpu_custom_call.1} parent=1 // pred_region
      %15 = vsyncadd [#allocation4], 0
      %s17 = sshll.u32 %s0, 4
      %s18 = int_to_ptr.hbm [resolvable:$true] %s17
      %s19 = sshll.u32 [#allocation3], 4
      %s20 = int_to_ptr.vmem [resolvable:$true] %s19
      %22 = dma.hbm_to_vmem [thread:$0]  %s18, 128, %s20, [#allocation4]
    $region5: #{tpu_custom_call.1} parent=1 // pred_fallthru
      _
    // Predicated region
    $region6: #{tpu_custom_call.1} parent=1 // pred_check
      _
    $region7: #{tpu_custom_call.1} parent=1 // pred_check_branch
      %24 = sbr.rel (0) target = $region9
    $region8: #{tpu_custom_call.1} parent=1 // pred_region
      %26 = vsyncadd [#allocation7], 0
      %s27 = sshll.u32 %s1, 4
      %s28 = int_to_ptr.hbm [resolvable:$true] %s27
      %s29 = sshll.u32 [#allocation6], 4
      %s30 = int_to_ptr.vmem [resolvable:$true] %s29
      %35 = dma.hbm_to_vmem [thread:$0]  %s28, 2048, %s30, [#allocation7], 128, 128, 8
    $region9: #{tpu_custom_call.1} parent=1 // pred_fallthru
      _
    // Predicated region
    $region10: #{tpu_custom_call.1} parent=1 // pred_check
      _
    $region11: #{tpu_custom_call.1} parent=1 // pred_check_branch
      %37 = sbr.rel (0) target = $region13
    $region12: #{tpu_custom_call.1} parent=1 // pred_region
      _
    $region13: #{tpu_custom_call.1} parent=1 // pred_fallthru
      _
    // Predicated region
    $region14: #{tpu_custom_call.1} parent=1 // pred_check
      _
    $region15: #{tpu_custom_call.1} parent=1 // pred_check_branch
      %39 = sbr.rel (0) target = $region17
    $region16: #{tpu_custom_call.1} parent=1 // pred_region
      _
    $region17: #{tpu_custom_call.1} parent=1 // pred_fallthru
      _
    // Predicated region
    $region18: #{tpu_custom_call.1} parent=1 // pred_check
      _
    $region19: #{tpu_custom_call.1} parent=1 // pred_check_branch
      %41 = sbr.rel (0) target = $region21
    $region20: #{tpu_custom_call.1} parent=1 // pred_region
      %43 = dma.done [#allocation4], 128
    $region21: #{tpu_custom_call.1} parent=1 // pred_fallthru
      _
    // Predicated region
    $region22: #{tpu_custom_call.1} parent=1 // pred_check
      _
    $region23: #{tpu_custom_call.1} parent=1 // pred_check_branch
      %45 = sbr.rel (0) target = $region25
    $region24: #{tpu_custom_call.1} parent=1 // pred_region
      %47 = dma.done [#allocation7], 2048
    $region25: #{tpu_custom_call.1} parent=1 // pred_fallthru
      _
    %s48 = smul.u32 0, 128
    %s49 = sshra.s32 %s48, 7
    %s50 = sand.u32 %s48, 127
    %s51 = scalar_lea.vmem [#allocation3], %s49
    %v52 = vld [vmem:[%s51] sm:$0xff]
    %v53 = vld [vmem:[#allocation6] sm:$0xff]
    %v54 = vld [vmem:[#allocation6 + $0x8] sm:$0xff]
    %v55 = vld [vmem:[#allocation6 + $0x10] sm:$0xff]
    %v56 = vld [vmem:[#allocation6 + $0x18] sm:$0xff]
    %v57 = vld [vmem:[#allocation6 + $0x20] sm:$0xff]
    %v58 = vld [vmem:[#allocation6 + $0x28] sm:$0xff]
    %v59 = vld [vmem:[#allocation6 + $0x30] sm:$0xff]
    %v60 = vld [vmem:[#allocation6 + $0x38] sm:$0xff]
    %v61 = vld [vmem:[#allocation6 + $0x40] sm:$0xff]
    %v62 = vld [vmem:[#allocation6 + $0x48] sm:$0xff]
    %v63 = vld [vmem:[#allocation6 + $0x50] sm:$0xff]
    %v64 = vld [vmem:[#allocation6 + $0x58] sm:$0xff]
    %v65 = vld [vmem:[#allocation6 + $0x60] sm:$0xff]
    %v66 = vld [vmem:[#allocation6 + $0x68] sm:$0xff]
    %v67 = vld [vmem:[#allocation6 + $0x70] sm:$0xff]
    %v68 = vld [vmem:[#allocation6 + $0x78] sm:$0xff]
    %69 = vmatpush.msra.mxu0 %v68
    %70 = vmatpush.msra.mxu0 %v67
    %71 = vmatpush.msra.mxu0 %v66
    %72 = vmatpush.msra.mxu0 %v65
    %73 = vmatpush.msra.mxu0 %v64
    %74 = vmatpush.msra.mxu0 %v63
    %75 = vmatpush.msra.mxu0 %v62
    %76 = vmatpush.msra.mxu0 %v61
    %77 = vmatpush.msra.mxu0 %v60
    %78 = vmatpush.msra.mxu0 %v59
    %79 = vmatpush.msra.mxu0 %v58
    %80 = vmatpush.msra.mxu0 %v57
    %81 = vmatpush.msra.mxu0 %v56
    %82 = vmatpush.msra.mxu0 %v55
    %83 = vmatpush.msra.mxu0 %v54
    %84 = vmatpush.msra.mxu0 %v53
    %85 = vmatmul.f32.gmra.mxu0 %v52
    %v86 = vpop.f32.mrf.mxu0
    %v87 = vadd.f32 0.0, %v86
    %88 = vdwg.mxu0
    %p89 = scmp.eq.s32.totalorder 0, 0
    // Predicated region
    $region26: #{tpu_custom_call.1} parent=1 // pred_check
      %p90 = pneg %p89
    $region27: #{tpu_custom_call.1} parent=1 // pred_check_branch
      %92 = sbr.rel (%p90) target = $region29
    $region28: #{tpu_custom_call.1} parent=1 // pred_region
      %93 = vst [vmem:[#allocation2] sm:$0xff] %v87
    $region29: #{tpu_custom_call.1} parent=1 // pred_fallthru
      _
    %p94 = scmp.gt.s32.totalorder 0, 0
    // Predicated region
    $region30: #{tpu_custom_call.1} parent=1 // pred_check
      %p95 = pneg %p94
    $region31: #{tpu_custom_call.1} parent=1 // pred_check_branch
      %97 = sbr.rel (%p95) target = $region33
    $region32: #{tpu_custom_call.1} parent=1 // pred_region
      %v98 = vld [vmem:[#allocation2] sm:$0xff]
      %v99 = vadd.f32 %v98, %v87
      %100 = vst [vmem:[#allocation2] sm:$0xff] %v99
    $region33: #{tpu_custom_call.1} parent=1 // pred_fallthru
      _
    // Predicated region
    $region34: #{tpu_custom_call.1} parent=1 // pred_check
      %p101 = pneg %p89
    $region35: #{tpu_custom_call.1} parent=1 // pred_check_branch
      %103 = sbr.rel (%p101) target = $region37
    $region36: #{tpu_custom_call.1} parent=1 // pred_region
      %v104 = vld [vmem:[#allocation2] sm:$0xff]
      %v105 = vrot.slane %v104, 4
      %v106 = vadd.f32 %v104, %v105
      %v107 = vrot.slane %v106, 2
      %v108 = vadd.f32 %v106, %v107
      %v109 = vrot.slane %v108, 1
      %v110 = vadd.f32 %v108, %v109
      %v111 = vrcp.pop 8.0
      %v112 = vmul.f32 8.0, %v111
      %v113 = vsub.f32 1.0, %v112
      %v114 = vmul.f32 %v111, %v113
      %v115 = vadd.f32 %v111, %v114
      %vm116 = vweird.f32 %v111
      %v117 = vsel %vm116, %v111, %v115
      %v118 = vmul.f32 %v110, %v117
      %v119 = vsub.f32 %v104, %v118
      %v120 = vmul.f32 %v119, %v119
      %v121 = vrot.slane %v120, 4
      %v122 = vadd.f32 %v120, %v121
      %v123 = vrot.slane %v122, 2
      %v124 = vadd.f32 %v122, %v123
      %v125 = vrot.slane %v124, 1
      %v126 = vadd.f32 %v124, %v125
      %v127 = vmul.f32 %v126, %v117
      %v128 = vadd.f32 %v127, 1e-05
      %v129 = vrsqrt.pop %v128
      %v130 = vmul.f32 %v129, %v128
      %v131 = vmul.f32 %v130, %v129
      %v132 = vmul.f32 0.5, %v131
      %v133 = vsub.f32 1.5, %v132
      %v134 = vmul.f32 %v129, %v133
      %vm135 = vweird.f32 %v128
      %vm136 = vweird.f32 %v129
      %vm137 = vmor %vm135, %vm136
      %v138 = vsel %vm137, %v129, %v134
      %v139 = vmul.f32 %v119, %v138
      %v140 = vld [vmem:[%s2] sm:$0x1]
      %v142 = vperm.slane %v140, 0
      %v144 = vmul.f32 %v139, %v142
      %v145 = vld [vmem:[%s3] sm:$0x1]
      %v147 = vperm.slane %v145, 0
      %v149 = vadd.f32 %v144, %v147
      %150 = vst [vmem:[#allocation8] sm:$0xff] %v149
    $region37: #{tpu_custom_call.1} parent=1 // pred_fallthru
      _
    // Predicated region
    $region38: #{tpu_custom_call.1} parent=1 // pred_check
      _
    $region39: #{tpu_custom_call.1} parent=1 // pred_check_branch
      %152 = sbr.rel (0) target = $region41
    $region40: #{tpu_custom_call.1} parent=1 // pred_region
      %154 = vsyncadd [#allocation5], 0
      %s156 = sshll.u32 [#allocation8], 4
      %s157 = int_to_ptr.vmem [resolvable:$true] %s156
      %s158 = sshll.u32 %s4, 4
      %s159 = int_to_ptr.hbm [resolvable:$true] %s158
      %161 = dma.vmem_to_hbm [thread:$0]  %s157, 128, %s159, [#allocation5]
    $region41: #{tpu_custom_call.1} parent=1 // pred_fallthru
      _
    // Predicated region
    $region42: #{tpu_custom_call.1} parent=1 // pred_check
      _
    $region43: #{tpu_custom_call.1} parent=1 // pred_check_branch
      %163 = sbr.rel (0) target = $region45
    $region44: #{tpu_custom_call.1} parent=1 // pred_region
      %165 = dma.done [#allocation5], 128
    $region45: #{tpu_custom_call.1} parent=1 // pred_fallthru
      _
    %166 = vsyncpa [#allocation4], 1
    %167 = vsyncpa [#allocation7], 1
    %168 = vsyncpa [#allocation5], 1

</llo_original>
